<compile_context>
chip_gen: v5e
topology: v5e:2x2
jax: 0.10.0
libtpu: 0.0.40
codegen_flags: <defaults>
</compile_context>

<pallas_src>
import functools
import math

import jax
import jax.numpy as jnp
from jax import lax
from jax.experimental import pallas as pl
from jax.experimental.pallas import tpu as pltpu


# ----------------------------------------------------------------------------
# Kernel: one block of Nb batch elements, unrolled loop over heads.
# refs:
#   x_ref   : (Nb, T, D)  batch-major activations
#   wq_ref  : (H, D, Hd)  scaled q-projection weights (2/sqrt(Hd) folded in)
#   b_ref   : (H, D, Hd)  B_h = (Wq_h Wq_h^T / sqrt(Hd)) @ Wv_h
#   woh_ref : (H, Hd, D)  out_proj.weight^T, head-major
#   bo_ref  : (1, D)      out_proj.bias (f32)
#   o_ref   : (Nb, T, D)  output block
# ----------------------------------------------------------------------------
def l2mha_kernel(x_ref, wq_ref, b_ref, woh_ref, bo_ref, o_ref, *, mxu_dtype):
    Nb, T, D = x_ref.shape
    H, _, Hd = wq_ref.shape
    adt = mxu_dtype if mxu_dtype is not None else x_ref.dtype  # attn MXU dtype

    # (Nb, T, D) -> (Nb*T, D): layout-free leading-dim collapse (T is a whole
    # number of sublane tiles whenever Nb > 1; enforced by the wrapper).
    x2 = x_ref[...].reshape(Nb * T, D)

    acc = jnp.zeros((Nb * T, D), jnp.float32)   # fused head-concat + out_proj

    for h in range(H):
        # Per-head projections (f32 accumulation on the MXU).
        q = jnp.dot(x2, wq_ref[h], preferred_element_type=jnp.float32)
        xb = jnp.dot(x2, b_ref[h], preferred_element_type=jnp.float32)
        q = q.astype(adt).reshape(Nb, T, Hd)
        xb = xb.astype(adt).reshape(Nb, T, Hd)

        # L2 logits: -(|q_t|^2 + |q_s|^2 - 2 q_t.q_s)/sqrt(Hd). The |q_t|^2
        # term is constant along the key axis and cancels in the softmax; the
        # 2/sqrt(Hd) scale is already folded into Wq, so only gram - ssq/2.
        gram = lax.dot_general(q, q, (((2,), (2,)), ((0,), (0,))),
                               preferred_element_type=jnp.float32)   # (Nb,T,T)
        q32 = q.astype(jnp.float32)
        ssq = jnp.sum(q32 * q32, axis=-1)                            # (Nb,T)
        logits = gram - 0.5 * ssq[:, None, :]

        # Softmax over the key axis (f32 math; reciprocal on the EUP slot).
        m = jnp.max(logits, axis=-1, keepdims=True)
        e = jnp.exp(logits - m)
        denom = jnp.sum(e, axis=-1, keepdims=True)
        attn = e * pl.reciprocal(denom, approx=True)                 # (Nb,T,T)

        # Apply attention to x@B_h, then accumulate this head's out-proj slice.
        pxb = lax.dot_general(attn.astype(adt), xb,
                              (((2,), (1,)), ((0,), (0,))),
                              preferred_element_type=jnp.float32)    # (Nb,T,Hd)
        acc = acc + jnp.dot(pxb.reshape(Nb * T, Hd).astype(woh_ref.dtype),
                            woh_ref[h], preferred_element_type=jnp.float32)

    y = acc + bo_ref[...].astype(jnp.float32)
    o_ref[...] = y.reshape(Nb, T, D).astype(o_ref.dtype)


# ----------------------------------------------------------------------------
# VMEM sizing helpers.
# ----------------------------------------------------------------------------
def _sublane(itemsize):
    return max(8, 32 // itemsize)            # 8 f32, 16 bf16, 32 i8


def _vmem_budget_and_limit():
    """Generation-aware working-set budget and scoped-VMEM limit (bytes)."""
    try:
        cap = int(pltpu.get_tpu_info().vmem_capacity_bytes)
    except Exception:
        cap = 64 << 20                       # conservative fallback
    if cap <= (64 << 20):                    # v7x-class: 64 MiB per TensorCore
        budget = 20 << 20
    else:                                    # v5e / v6e: 128 MiB
        budget = 40 << 20
    limit = min(budget + (16 << 20), cap * 3 // 4)
    return budget, limit


def _pick_batch_block(N, T, D, H, itemsize, budget_bytes):
    """Largest divisor of N whose real per-step live set fits the budget,
    capped so the grid has >=2 (ideally >=4) steps for megacore sharding."""
    Hd = D // H
    if T % _sublane(itemsize) != 0:
        return 1                             # keep in-kernel reshapes layout-free

    def live_bytes(nb):
        rows = nb * T
        weights = 2 * (2 * H * D * Hd + H * Hd * D) * itemsize + 2 * 4 * D
        io = 2 * 2 * rows * D * itemsize     # double-buffered input + output
        x2 = rows * D * itemsize             # flattened activation copy
        acc = rows * D * 4                   # f32 out-proj accumulator
        softmax = 4 * rows * T * 4           # one head's gram/logits/e/attn
        head = 4 * rows * Hd * 4             # per-head q / x@B (f32 + casts)
        return weights + io + x2 + acc + softmax + head

    target_steps = 4 if N >= 4 else (2 if N >= 2 else 1)
    nb = max(1, N // target_steps)
    while nb > 1 and (N % nb or live_bytes(nb) > budget_bytes):
        nb -= 1
    return nb


# ----------------------------------------------------------------------------
# Wrapper.
# ----------------------------------------------------------------------------
def l2_multihead_attention(x, q_weight, v_weight, out_w, out_b, num_heads,
                           *, batch_block=None, time_major=True, mxu_dtype=None):
    """L2 multi-head self-attention forward.

    x: (T, N, D) if time_major (PyTorch convention), else (N, T, D).
    q_weight, v_weight: (D, H, Hd). out_w: (D, D) torch Linear weight. out_b: (D,).
    mxu_dtype: optional operand dtype (e.g. jnp.bfloat16) for the gram /
      attention-apply matmuls when activations are f32 (v5e/v6e MXU rate).
    """
    x_bt = jnp.transpose(x, (1, 0, 2)) if time_major else x   # (N, T, D)
    N, T, D = x_bt.shape
    H = num_heads
    Hd = D // H
    assert Hd * H == D, "embed_dim must be divisible by num_heads"
    itemsize = jnp.dtype(x.dtype).itemsize
    scale = 1.0 / math.sqrt(Hd)

    # ---- weight-only math, hoisted out of the kernel (runs once in XLA) ----
    # Fold the 2/sqrt(Hd) logits scale into Wq; kernel computes gram - ssq/2.
    wq_h = (jnp.transpose(q_weight, (1, 0, 2))
            * math.sqrt(2.0 * scale)).astype(x.dtype)                 # (H, D, Hd)
    A = jnp.einsum('mhd,nhd->hmn', q_weight, q_weight) * scale        # (H, D, D)
    b_h = jnp.einsum('hmn,nhe->hme', A, v_weight).astype(x.dtype)     # (H, D, Hd)
    woh = out_w.T.reshape(H, Hd, D).astype(x.dtype)                   # (H, Hd, D)
    bo = out_b.reshape(1, D).astype(jnp.float32)

    budget, vmem_limit = _vmem_budget_and_limit()
    if batch_block is None:
        batch_block = _pick_batch_block(N, T, D, H, itemsize, budget)
    assert N % batch_block == 0, "batch_block must divide the batch size"
    if batch_block > 1:
        assert T % _sublane(itemsize) == 0, (
            "batch_block > 1 requires T to be a whole number of sublane tiles")
    grid = (N // batch_block,)

    cost = pl.CostEstimate(
        flops=int(N * (6 * T * D * D + 4 * T * T * D)),
        transcendentals=int(N * H * T * T),
        bytes_accessed=int(itemsize * (2 * N * T * D + 3 * D * D) + 4 * D))

    out_bt = pl.pallas_call(
        functools.partial(l2mha_kernel, mxu_dtype=mxu_dtype),
        out_shape=jax.ShapeDtypeStruct((N, T, D), x.dtype),
        grid_spec=pltpu.PrefetchScalarGridSpec(
            num_scalar_prefetch=0,
            grid=grid,
            in_specs=[
                pl.BlockSpec((batch_block, T, D), lambda b: (b, 0, 0)),
                pl.BlockSpec((H, D, Hd), lambda b: (0, 0, 0)),
                pl.BlockSpec((H, D, Hd), lambda b: (0, 0, 0)),
                pl.BlockSpec((H, Hd, D), lambda b: (0, 0, 0)),
                pl.BlockSpec((1, D), lambda b: (0, 0)),
            ],
            out_specs=pl.BlockSpec((batch_block, T, D), lambda b: (b, 0, 0)),
        ),
        compiler_params=pltpu.CompilerParams(
            dimension_semantics=("parallel",),
            vmem_limit_bytes=int(vmem_limit)),
        cost_estimate=cost,
    )(x_bt, wq_h, b_h, woh, bo)

    return jnp.transpose(out_bt, (1, 0, 2)) if time_major else out_bt


# ----------------------------------------------------------------------------
# Pure-JAX reference (mirrors the PyTorch einsums) for verification.
# ----------------------------------------------------------------------------
def ref_forward(x, q_weight, v_weight, out_w, out_b, num_heads):
    T, N, D = x.shape
    Hd = D // num_heads
    q = jnp.einsum('tbm,mhd->tbhd', x, q_weight)
    k = jnp.einsum('tbm,mhd->tbhd', x, q_weight)
    sq_dist = (jnp.einsum('tbhd,tbhd->tbh', q, q)[:, None]
               + jnp.einsum('sbhd,sbhd->sbh', k, k)[None]
               - 2.0 * jnp.einsum('tbhd,sbhd->tsbh', q, k))
    logits = -sq_dist / math.sqrt(Hd)
    attn = jax.nn.softmax(logits, axis=1)
    A = jnp.einsum('mhd,nhd->hmn', q_weight, q_weight) / math.sqrt(Hd)
    XA = jnp.einsum('tbm,hmn->tbhn', x, A)
    PXA = jnp.einsum('tsbh,sbhm->tbhm', attn, XA)
    PXAV = jnp.einsum('tbhm,mhd->tbhd', PXA, v_weight).reshape(T, N, D)
    return PXAV @ out_w.T + out_b


if __name__ == "__main__":
    # Small shapes consistent with the module: seq T=8, batch N=2, embed D=32, heads H=4.
    T, N, D, H = 8, 2, 32, 4
    Hd = D // H

    key = jax.random.PRNGKey(0)
    k_x, k_q, k_v, k_w, k_b = jax.random.split(key, 5)

    # Deterministic parameter init (xavier-uniform-like bounds; synthetic).
    xav = math.sqrt(6.0 / (D + D))
    q_weight = jax.random.uniform(k_q, (D, H, Hd), jnp.float32, -xav, xav)
    v_weight = jax.random.uniform(k_v, (D, H, Hd), jnp.float32, -xav, xav)
    lin_bound = 1.0 / math.sqrt(D)
    out_w = jax.random.uniform(k_w, (D, D), jnp.float32, -lin_bound, lin_bound)
    out_b = jax.random.uniform(k_b, (D,), jnp.float32, -lin_bound, lin_bound)

    x = jax.random.normal(k_x, (T, N, D), jnp.float32)

    out = l2_multihead_attention(x, q_weight, v_weight, out_w, out_b, H)
    out = jax.block_until_ready(out)

    ref = ref_forward(x, q_weight, v_weight, out_w, out_b, H)
    assert out.shape == (T, N, D)
    # Tolerance accounts for the approximate EUP reciprocal in the softmax
    # normalization (~1e-3 relative); structural errors would be O(0.1-1).
    assert jnp.allclose(out, ref, atol=5e-3, rtol=5e-3), (
        f"max abs err {jnp.max(jnp.abs(out - ref))}")

    print("KERNEL_OK")
</pallas_src>

<mosaic_0001>
module attributes {stable_mosaic.version = 11 : i64} {
  func.func @l2mha_kernel(%arg0: i32, %arg1: memref<1x8x32xf32, #tpu.memory_space<vmem>>, %arg2: memref<4x32x8xf32, #tpu.memory_space<vmem>>, %arg3: memref<4x32x8xf32, #tpu.memory_space<vmem>>, %arg4: memref<4x8x32xf32, #tpu.memory_space<vmem>>, %arg5: memref<1x32xf32, #tpu.memory_space<vmem>>, %arg6: memref<1x8x32xf32, #tpu.memory_space<vmem>>) attributes {dimension_semantics = [#tpu.dimension_semantics<parallel>], iteration_bounds = array<i64: 2>, scalar_prefetch = 0 : i64, scratch_operands = 0 : i64, tpu.core_type = #tpu.core_type<tc>, window_params = [{transform_indices = @transform_0, window_bounds = array<i64: 1, 8, 32>}, {pipeline_mode = #tpu.pipeline_mode<synchronous>, transform_indices = @transform_1, window_bounds = array<i64: 4, 32, 8>}, {pipeline_mode = #tpu.pipeline_mode<synchronous>, transform_indices = @transform_2, window_bounds = array<i64: 4, 32, 8>}, {pipeline_mode = #tpu.pipeline_mode<synchronous>, transform_indices = @transform_3, window_bounds = array<i64: 4, 8, 32>}, {pipeline_mode = #tpu.pipeline_mode<synchronous>, transform_indices = @transform_4, window_bounds = array<i64: 1, 32>}, {transform_indices = @transform_5, window_bounds = array<i64: 1, 8, 32>}]} {
    %c0 = arith.constant 0 : index
    %c0_0 = arith.constant 0 : index
    %c0_1 = arith.constant 0 : index
    %0 = vector.load %arg1[%c0, %c0_0, %c0_1] : memref<1x8x32xf32, #tpu.memory_space<vmem>>, vector<1x8x32xf32>
    %1 = vector.shape_cast %0 : vector<1x8x32xf32> to vector<8x32xf32>
    %cst = arith.constant 0.000000e+00 : f32
    %2 = vector.broadcast %cst : f32 to vector<8x32xf32>
    %c0_2 = arith.constant 0 : index
    %c0_3 = arith.constant 0 : index
    %c0_4 = arith.constant 0 : index
    %3 = vector.load %arg2[%c0_2, %c0_3, %c0_4] : memref<4x32x8xf32, #tpu.memory_space<vmem>>, vector<1x32x8xf32>
    %4 = vector.shape_cast %3 : vector<1x32x8xf32> to vector<32x8xf32>
    %cst_5 = arith.constant dense<0.000000e+00> : vector<8x8xf32>
    %5 = tpu.matmul %1, %4, %cst_5 {dimension_numbers = #tpu.dot_dimension_numbers<[1], [0], [0], [1], [0, 0, 1, 1], [], []>} : vector<8x32xf32>, vector<32x8xf32>, vector<8x8xf32> -> vector<8x8xf32>
    %c0_6 = arith.constant 0 : index
    %c0_7 = arith.constant 0 : index
    %c0_8 = arith.constant 0 : index
    %6 = vector.load %arg3[%c0_6, %c0_7, %c0_8] : memref<4x32x8xf32, #tpu.memory_space<vmem>>, vector<1x32x8xf32>
    %7 = vector.shape_cast %6 : vector<1x32x8xf32> to vector<32x8xf32>
    %cst_9 = arith.constant dense<0.000000e+00> : vector<8x8xf32>
    %8 = tpu.matmul %1, %7, %cst_9 {dimension_numbers = #tpu.dot_dimension_numbers<[1], [0], [0], [1], [0, 0, 1, 1], [], []>} : vector<8x32xf32>, vector<32x8xf32>, vector<8x8xf32> -> vector<8x8xf32>
    %9 = vector.shape_cast %5 : vector<8x8xf32> to vector<1x8x8xf32>
    %10 = vector.shape_cast %8 : vector<8x8xf32> to vector<1x8x8xf32>
    %cst_10 = arith.constant dense<0.000000e+00> : vector<1x8x8xf32>
    %11 = tpu.matmul %9, %9, %cst_10 {dimension_numbers = #tpu.dot_dimension_numbers<[2], [2], [1], [1], [0, 0, 0, 1, 1, 1], [0], [0]>} : vector<1x8x8xf32>, vector<1x8x8xf32>, vector<1x8x8xf32> -> vector<1x8x8xf32>
    %12 = arith.mulf %9, %9 : vector<1x8x8xf32>
    %cst_11 = arith.constant dense<0.000000e+00> : vector<1x8xf32>
    %13 = vector.multi_reduction <add>, %12, %cst_11 [2] : vector<1x8x8xf32> to vector<1x8xf32>
    %14 = vector.shape_cast %13 : vector<1x8xf32> to vector<1x1x8xf32>
    %cst_12 = arith.constant 5.000000e-01 : f32
    %15 = vector.broadcast %cst_12 : f32 to vector<1x1x8xf32>
    %16 = arith.mulf %15, %14 : vector<1x1x8xf32>
    %17 = vector.broadcast %16 : vector<1x1x8xf32> to vector<1x8x8xf32>
    %18 = arith.subf %11, %17 : vector<1x8x8xf32>
    %cst_13 = arith.constant dense<0xFF800000> : vector<1x8xf32>
    %19 = vector.multi_reduction <maximumf>, %18, %cst_13 [2] : vector<1x8x8xf32> to vector<1x8xf32>
    %20 = vector.shape_cast %19 : vector<1x8xf32> to vector<1x8x1xf32>
    %21 = vector.broadcast %20 : vector<1x8x1xf32> to vector<1x8x8xf32>
    %22 = arith.subf %18, %21 : vector<1x8x8xf32>
    %23 = math.exp %22 : vector<1x8x8xf32>
    %cst_14 = arith.constant dense<0.000000e+00> : vector<1x8xf32>
    %24 = vector.multi_reduction <add>, %23, %cst_14 [2] : vector<1x8x8xf32> to vector<1x8xf32>
    %25 = vector.shape_cast %24 : vector<1x8xf32> to vector<1x8x1xf32>
    %26 = tpu.reciprocal %25 {approx = true} : vector<1x8x1xf32> -> vector<1x8x1xf32>
    %27 = vector.broadcast %26 : vector<1x8x1xf32> to vector<1x8x8xf32>
    %28 = arith.mulf %23, %27 : vector<1x8x8xf32>
    %cst_15 = arith.constant dense<0.000000e+00> : vector<1x8x8xf32>
    %29 = tpu.matmul %28, %10, %cst_15 {dimension_numbers = #tpu.dot_dimension_numbers<[2], [1], [1], [2], [0, 0, 0, 1, 1, 2], [0], [0]>} : vector<1x8x8xf32>, vector<1x8x8xf32>, vector<1x8x8xf32> -> vector<1x8x8xf32>
    %30 = vector.shape_cast %29 : vector<1x8x8xf32> to vector<8x8xf32>
    %c0_16 = arith.constant 0 : index
    %c0_17 = arith.constant 0 : index
    %c0_18 = arith.constant 0 : index
    %31 = vector.load %arg4[%c0_16, %c0_17, %c0_18] : memref<4x8x32xf32, #tpu.memory_space<vmem>>, vector<1x8x32xf32>
    %32 = vector.shape_cast %31 : vector<1x8x32xf32> to vector<8x32xf32>
    %cst_19 = arith.constant dense<0.000000e+00> : vector<8x32xf32>
    %33 = tpu.matmul %30, %32, %cst_19 {dimension_numbers = #tpu.dot_dimension_numbers<[1], [0], [0], [1], [0, 0, 1, 1], [], []>} : vector<8x8xf32>, vector<8x32xf32>, vector<8x32xf32> -> vector<8x32xf32>
    %34 = arith.addf %2, %33 : vector<8x32xf32>
    %c1 = arith.constant 1 : index
    %c0_20 = arith.constant 0 : index
    %c0_21 = arith.constant 0 : index
    %35 = vector.load %arg2[%c1, %c0_20, %c0_21] : memref<4x32x8xf32, #tpu.memory_space<vmem>>, vector<1x32x8xf32>
    %36 = vector.shape_cast %35 : vector<1x32x8xf32> to vector<32x8xf32>
    %cst_22 = arith.constant dense<0.000000e+00> : vector<8x8xf32>
    %37 = tpu.matmul %1, %36, %cst_22 {dimension_numbers = #tpu.dot_dimension_numbers<[1], [0], [0], [1], [0, 0, 1, 1], [], []>} : vector<8x32xf32>, vector<32x8xf32>, vector<8x8xf32> -> vector<8x8xf32>
    %c1_23 = arith.constant 1 : index
    %c0_24 = arith.constant 0 : index
    %c0_25 = arith.constant 0 : index
    %38 = vector.load %arg3[%c1_23, %c0_24, %c0_25] : memref<4x32x8xf32, #tpu.memory_space<vmem>>, vector<1x32x8xf32>
    %39 = vector.shape_cast %38 : vector<1x32x8xf32> to vector<32x8xf32>
    %cst_26 = arith.constant dense<0.000000e+00> : vector<8x8xf32>
    %40 = tpu.matmul %1, %39, %cst_26 {dimension_numbers = #tpu.dot_dimension_numbers<[1], [0], [0], [1], [0, 0, 1, 1], [], []>} : vector<8x32xf32>, vector<32x8xf32>, vector<8x8xf32> -> vector<8x8xf32>
    %41 = vector.shape_cast %37 : vector<8x8xf32> to vector<1x8x8xf32>
    %42 = vector.shape_cast %40 : vector<8x8xf32> to vector<1x8x8xf32>
    %cst_27 = arith.constant dense<0.000000e+00> : vector<1x8x8xf32>
    %43 = tpu.matmul %41, %41, %cst_27 {dimension_numbers = #tpu.dot_dimension_numbers<[2], [2], [1], [1], [0, 0, 0, 1, 1, 1], [0], [0]>} : vector<1x8x8xf32>, vector<1x8x8xf32>, vector<1x8x8xf32> -> vector<1x8x8xf32>
    %44 = arith.mulf %41, %41 : vector<1x8x8xf32>
    %cst_28 = arith.constant dense<0.000000e+00> : vector<1x8xf32>
    %45 = vector.multi_reduction <add>, %44, %cst_28 [2] : vector<1x8x8xf32> to vector<1x8xf32>
    %46 = vector.shape_cast %45 : vector<1x8xf32> to vector<1x1x8xf32>
    %cst_29 = arith.constant 5.000000e-01 : f32
    %47 = vector.broadcast %cst_29 : f32 to vector<1x1x8xf32>
    %48 = arith.mulf %47, %46 : vector<1x1x8xf32>
    %49 = vector.broadcast %48 : vector<1x1x8xf32> to vector<1x8x8xf32>
    %50 = arith.subf %43, %49 : vector<1x8x8xf32>
    %cst_30 = arith.constant dense<0xFF800000> : vector<1x8xf32>
    %51 = vector.multi_reduction <maximumf>, %50, %cst_30 [2] : vector<1x8x8xf32> to vector<1x8xf32>
    %52 = vector.shape_cast %51 : vector<1x8xf32> to vector<1x8x1xf32>
    %53 = vector.broadcast %52 : vector<1x8x1xf32> to vector<1x8x8xf32>
    %54 = arith.subf %50, %53 : vector<1x8x8xf32>
    %55 = math.exp %54 : vector<1x8x8xf32>
    %cst_31 = arith.constant dense<0.000000e+00> : vector<1x8xf32>
    %56 = vector.multi_reduction <add>, %55, %cst_31 [2] : vector<1x8x8xf32> to vector<1x8xf32>
    %57 = vector.shape_cast %56 : vector<1x8xf32> to vector<1x8x1xf32>
    %58 = tpu.reciprocal %57 {approx = true} : vector<1x8x1xf32> -> vector<1x8x1xf32>
    %59 = vector.broadcast %58 : vector<1x8x1xf32> to vector<1x8x8xf32>
    %60 = arith.mulf %55, %59 : vector<1x8x8xf32>
    %cst_32 = arith.constant dense<0.000000e+00> : vector<1x8x8xf32>
    %61 = tpu.matmul %60, %42, %cst_32 {dimension_numbers = #tpu.dot_dimension_numbers<[2], [1], [1], [2], [0, 0, 0, 1, 1, 2], [0], [0]>} : vector<1x8x8xf32>, vector<1x8x8xf32>, vector<1x8x8xf32> -> vector<1x8x8xf32>
    %62 = vector.shape_cast %61 : vector<1x8x8xf32> to vector<8x8xf32>
    %c1_33 = arith.constant 1 : index
    %c0_34 = arith.constant 0 : index
    %c0_35 = arith.constant 0 : index
    %63 = vector.load %arg4[%c1_33, %c0_34, %c0_35] : memref<4x8x32xf32, #tpu.memory_space<vmem>>, vector<1x8x32xf32>
    %64 = vector.shape_cast %63 : vector<1x8x32xf32> to vector<8x32xf32>
    %cst_36 = arith.constant dense<0.000000e+00> : vector<8x32xf32>
    %65 = tpu.matmul %62, %64, %cst_36 {dimension_numbers = #tpu.dot_dimension_numbers<[1], [0], [0], [1], [0, 0, 1, 1], [], []>} : vector<8x8xf32>, vector<8x32xf32>, vector<8x32xf32> -> vector<8x32xf32>
    %66 = arith.addf %34, %65 : vector<8x32xf32>
    %c2 = arith.constant 2 : index
    %c0_37 = arith.constant 0 : index
    %c0_38 = arith.constant 0 : index
    %67 = vector.load %arg2[%c2, %c0_37, %c0_38] : memref<4x32x8xf32, #tpu.memory_space<vmem>>, vector<1x32x8xf32>
    %68 = vector.shape_cast %67 : vector<1x32x8xf32> to vector<32x8xf32>
    %cst_39 = arith.constant dense<0.000000e+00> : vector<8x8xf32>
    %69 = tpu.matmul %1, %68, %cst_39 {dimension_numbers = #tpu.dot_dimension_numbers<[1], [0], [0], [1], [0, 0, 1, 1], [], []>} : vector<8x32xf32>, vector<32x8xf32>, vector<8x8xf32> -> vector<8x8xf32>
    %c2_40 = arith.constant 2 : index
    %c0_41 = arith.constant 0 : index
    %c0_42 = arith.constant 0 : index
    %70 = vector.load %arg3[%c2_40, %c0_41, %c0_42] : memref<4x32x8xf32, #tpu.memory_space<vmem>>, vector<1x32x8xf32>
    %71 = vector.shape_cast %70 : vector<1x32x8xf32> to vector<32x8xf32>
    %cst_43 = arith.constant dense<0.000000e+00> : vector<8x8xf32>
    %72 = tpu.matmul %1, %71, %cst_43 {dimension_numbers = #tpu.dot_dimension_numbers<[1], [0], [0], [1], [0, 0, 1, 1], [], []>} : vector<8x32xf32>, vector<32x8xf32>, vector<8x8xf32> -> vector<8x8xf32>
    %73 = vector.shape_cast %69 : vector<8x8xf32> to vector<1x8x8xf32>
    %74 = vector.shape_cast %72 : vector<8x8xf32> to vector<1x8x8xf32>
    %cst_44 = arith.constant dense<0.000000e+00> : vector<1x8x8xf32>
    %75 = tpu.matmul %73, %73, %cst_44 {dimension_numbers = #tpu.dot_dimension_numbers<[2], [2], [1], [1], [0, 0, 0, 1, 1, 1], [0], [0]>} : vector<1x8x8xf32>, vector<1x8x8xf32>, vector<1x8x8xf32> -> vector<1x8x8xf32>
    %76 = arith.mulf %73, %73 : vector<1x8x8xf32>
    %cst_45 = arith.constant dense<0.000000e+00> : vector<1x8xf32>
    %77 = vector.multi_reduction <add>, %76, %cst_45 [2] : vector<1x8x8xf32> to vector<1x8xf32>
    %78 = vector.shape_cast %77 : vector<1x8xf32> to vector<1x1x8xf32>
    %cst_46 = arith.constant 5.000000e-01 : f32
    %79 = vector.broadcast %cst_46 : f32 to vector<1x1x8xf32>
    %80 = arith.mulf %79, %78 : vector<1x1x8xf32>
    %81 = vector.broadcast %80 : vector<1x1x8xf32> to vector<1x8x8xf32>
    %82 = arith.subf %75, %81 : vector<1x8x8xf32>
    %cst_47 = arith.constant dense<0xFF800000> : vector<1x8xf32>
    %83 = vector.multi_reduction <maximumf>, %82, %cst_47 [2] : vector<1x8x8xf32> to vector<1x8xf32>
    %84 = vector.shape_cast %83 : vector<1x8xf32> to vector<1x8x1xf32>
    %85 = vector.broadcast %84 : vector<1x8x1xf32> to vector<1x8x8xf32>
    %86 = arith.subf %82, %85 : vector<1x8x8xf32>
    %87 = math.exp %86 : vector<1x8x8xf32>
    %cst_48 = arith.constant dense<0.000000e+00> : vector<1x8xf32>
    %88 = vector.multi_reduction <add>, %87, %cst_48 [2] : vector<1x8x8xf32> to vector<1x8xf32>
    %89 = vector.shape_cast %88 : vector<1x8xf32> to vector<1x8x1xf32>
    %90 = tpu.reciprocal %89 {approx = true} : vector<1x8x1xf32> -> vector<1x8x1xf32>
    %91 = vector.broadcast %90 : vector<1x8x1xf32> to vector<1x8x8xf32>
    %92 = arith.mulf %87, %91 : vector<1x8x8xf32>
    %cst_49 = arith.constant dense<0.000000e+00> : vector<1x8x8xf32>
    %93 = tpu.matmul %92, %74, %cst_49 {dimension_numbers = #tpu.dot_dimension_numbers<[2], [1], [1], [2], [0, 0, 0, 1, 1, 2], [0], [0]>} : vector<1x8x8xf32>, vector<1x8x8xf32>, vector<1x8x8xf32> -> vector<1x8x8xf32>
    %94 = vector.shape_cast %93 : vector<1x8x8xf32> to vector<8x8xf32>
    %c2_50 = arith.constant 2 : index
    %c0_51 = arith.constant 0 : index
    %c0_52 = arith.constant 0 : index
    %95 = vector.load %arg4[%c2_50, %c0_51, %c0_52] : memref<4x8x32xf32, #tpu.memory_space<vmem>>, vector<1x8x32xf32>
    %96 = vector.shape_cast %95 : vector<1x8x32xf32> to vector<8x32xf32>
    %cst_53 = arith.constant dense<0.000000e+00> : vector<8x32xf32>
    %97 = tpu.matmul %94, %96, %cst_53 {dimension_numbers = #tpu.dot_dimension_numbers<[1], [0], [0], [1], [0, 0, 1, 1], [], []>} : vector<8x8xf32>, vector<8x32xf32>, vector<8x32xf32> -> vector<8x32xf32>
    %98 = arith.addf %66, %97 : vector<8x32xf32>
    %c3 = arith.constant 3 : index
    %c0_54 = arith.constant 0 : index
    %c0_55 = arith.constant 0 : index
    %99 = vector.load %arg2[%c3, %c0_54, %c0_55] : memref<4x32x8xf32, #tpu.memory_space<vmem>>, vector<1x32x8xf32>
    %100 = vector.shape_cast %99 : vector<1x32x8xf32> to vector<32x8xf32>
    %cst_56 = arith.constant dense<0.000000e+00> : vector<8x8xf32>
    %101 = tpu.matmul %1, %100, %cst_56 {dimension_numbers = #tpu.dot_dimension_numbers<[1], [0], [0], [1], [0, 0, 1, 1], [], []>} : vector<8x32xf32>, vector<32x8xf32>, vector<8x8xf32> -> vector<8x8xf32>
    %c3_57 = arith.constant 3 : index
    %c0_58 = arith.constant 0 : index
    %c0_59 = arith.constant 0 : index
    %102 = vector.load %arg3[%c3_57, %c0_58, %c0_59] : memref<4x32x8xf32, #tpu.memory_space<vmem>>, vector<1x32x8xf32>
    %103 = vector.shape_cast %102 : vector<1x32x8xf32> to vector<32x8xf32>
    %cst_60 = arith.constant dense<0.000000e+00> : vector<8x8xf32>
    %104 = tpu.matmul %1, %103, %cst_60 {dimension_numbers = #tpu.dot_dimension_numbers<[1], [0], [0], [1], [0, 0, 1, 1], [], []>} : vector<8x32xf32>, vector<32x8xf32>, vector<8x8xf32> -> vector<8x8xf32>
    %105 = vector.shape_cast %101 : vector<8x8xf32> to vector<1x8x8xf32>
    %106 = vector.shape_cast %104 : vector<8x8xf32> to vector<1x8x8xf32>
    %cst_61 = arith.constant dense<0.000000e+00> : vector<1x8x8xf32>
    %107 = tpu.matmul %105, %105, %cst_61 {dimension_numbers = #tpu.dot_dimension_numbers<[2], [2], [1], [1], [0, 0, 0, 1, 1, 1], [0], [0]>} : vector<1x8x8xf32>, vector<1x8x8xf32>, vector<1x8x8xf32> -> vector<1x8x8xf32>
    %108 = arith.mulf %105, %105 : vector<1x8x8xf32>
    %cst_62 = arith.constant dense<0.000000e+00> : vector<1x8xf32>
    %109 = vector.multi_reduction <add>, %108, %cst_62 [2] : vector<1x8x8xf32> to vector<1x8xf32>
    %110 = vector.shape_cast %109 : vector<1x8xf32> to vector<1x1x8xf32>
    %cst_63 = arith.constant 5.000000e-01 : f32
    %111 = vector.broadcast %cst_63 : f32 to vector<1x1x8xf32>
    %112 = arith.mulf %111, %110 : vector<1x1x8xf32>
    %113 = vector.broadcast %112 : vector<1x1x8xf32> to vector<1x8x8xf32>
    %114 = arith.subf %107, %113 : vector<1x8x8xf32>
    %cst_64 = arith.constant dense<0xFF800000> : vector<1x8xf32>
    %115 = vector.multi_reduction <maximumf>, %114, %cst_64 [2] : vector<1x8x8xf32> to vector<1x8xf32>
    %116 = vector.shape_cast %115 : vector<1x8xf32> to vector<1x8x1xf32>
    %117 = vector.broadcast %116 : vector<1x8x1xf32> to vector<1x8x8xf32>
    %118 = arith.subf %114, %117 : vector<1x8x8xf32>
    %119 = math.exp %118 : vector<1x8x8xf32>
    %cst_65 = arith.constant dense<0.000000e+00> : vector<1x8xf32>
    %120 = vector.multi_reduction <add>, %119, %cst_65 [2] : vector<1x8x8xf32> to vector<1x8xf32>
    %121 = vector.shape_cast %120 : vector<1x8xf32> to vector<1x8x1xf32>
    %122 = tpu.reciprocal %121 {approx = true} : vector<1x8x1xf32> -> vector<1x8x1xf32>
    %123 = vector.broadcast %122 : vector<1x8x1xf32> to vector<1x8x8xf32>
    %124 = arith.mulf %119, %123 : vector<1x8x8xf32>
    %cst_66 = arith.constant dense<0.000000e+00> : vector<1x8x8xf32>
    %125 = tpu.matmul %124, %106, %cst_66 {dimension_numbers = #tpu.dot_dimension_numbers<[2], [1], [1], [2], [0, 0, 0, 1, 1, 2], [0], [0]>} : vector<1x8x8xf32>, vector<1x8x8xf32>, vector<1x8x8xf32> -> vector<1x8x8xf32>
    %126 = vector.shape_cast %125 : vector<1x8x8xf32> to vector<8x8xf32>
    %c3_67 = arith.constant 3 : index
    %c0_68 = arith.constant 0 : index
    %c0_69 = arith.constant 0 : index
    %127 = vector.load %arg4[%c3_67, %c0_68, %c0_69] : memref<4x8x32xf32, #tpu.memory_space<vmem>>, vector<1x8x32xf32>
    %128 = vector.shape_cast %127 : vector<1x8x32xf32> to vector<8x32xf32>
    %cst_70 = arith.constant dense<0.000000e+00> : vector<8x32xf32>
    %129 = tpu.matmul %126, %128, %cst_70 {dimension_numbers = #tpu.dot_dimension_numbers<[1], [0], [0], [1], [0, 0, 1, 1], [], []>} : vector<8x8xf32>, vector<8x32xf32>, vector<8x32xf32> -> vector<8x32xf32>
    %130 = arith.addf %98, %129 : vector<8x32xf32>
    %c0_71 = arith.constant 0 : index
    %c0_72 = arith.constant 0 : index
    %131 = vector.load %arg5[%c0_71, %c0_72] : memref<1x32xf32, #tpu.memory_space<vmem>>, vector<1x32xf32>
    %132 = vector.broadcast %131 : vector<1x32xf32> to vector<8x32xf32>
    %133 = arith.addf %130, %132 : vector<8x32xf32>
    %134 = vector.shape_cast %133 : vector<8x32xf32> to vector<1x8x32xf32>
    %c0_73 = arith.constant 0 : index
    %c0_74 = arith.constant 0 : index
    %c0_75 = arith.constant 0 : index
    %135 = vector.load %arg6[%c0_73, %c0_74, %c0_75] : memref<1x8x32xf32, #tpu.memory_space<vmem>>, vector<1x8x32xf32>
    tpu.vector_store %arg6[%c0_73, %c0_74, %c0_75], %134 {strides = array<i32>} : memref<1x8x32xf32, #tpu.memory_space<vmem>>, vector<1x8x32xf32>,
    return
  }
  func.func @transform_0(%arg0: i32) -> (i32, i32, i32) {
    %c0_i32 = arith.constant 0 : i32
    %c0_i32_0 = arith.constant 0 : i32
    %c0_i32_1 = arith.constant 0 : i32
    return %arg0, %c0_i32, %c0_i32_0 : i32, i32, i32
  }
  func.func @transform_1(%arg0: i32) -> (i32, i32, i32) {
    %c0_i32 = arith.constant 0 : i32
    %c0_i32_0 = arith.constant 0 : i32
    %c0_i32_1 = arith.constant 0 : i32
    %c0_i32_2 = arith.constant 0 : i32
    return %c0_i32, %c0_i32_0, %c0_i32_1 : i32, i32, i32
  }
  func.func @transform_2(%arg0: i32) -> (i32, i32, i32) {
    %c0_i32 = arith.constant 0 : i32
    %c0_i32_0 = arith.constant 0 : i32
    %c0_i32_1 = arith.constant 0 : i32
    %c0_i32_2 = arith.constant 0 : i32
    return %c0_i32, %c0_i32_0, %c0_i32_1 : i32, i32, i32
  }
  func.func @transform_3(%arg0: i32) -> (i32, i32, i32) {
    %c0_i32 = arith.constant 0 : i32
    %c0_i32_0 = arith.constant 0 : i32
    %c0_i32_1 = arith.constant 0 : i32
    %c0_i32_2 = arith.constant 0 : i32
    return %c0_i32, %c0_i32_0, %c0_i32_1 : i32, i32, i32
  }
  func.func @transform_4(%arg0: i32) -> (i32, i32) {
    %c0_i32 = arith.constant 0 : i32
    %c0_i32_0 = arith.constant 0 : i32
    %c0_i32_1 = arith.constant 0 : i32
    return %c0_i32, %c0_i32_0 : i32, i32
  }
  func.func @transform_5(%arg0: i32) -> (i32, i32, i32) {
    %c0_i32 = arith.constant 0 : i32
    %c0_i32_0 = arith.constant 0 : i32
    %c0_i32_1 = arith.constant 0 : i32
    return %arg0, %c0_i32, %c0_i32_0 : i32, i32, i32
  }
}

</mosaic_0001>

<llo_original>
// kernel: tpu_custom_call.1
$region0: #{tpu_custom_call.1}
  #allocation0 [shape = 'u32[]', space=smem, size = 0x4, offset = 0x4, fixed_abs, tag = 'smem constant byte address 0x4 - core index']
  #allocation1 [shape = 'u32[72,128]{1,0:T(1,128)}', space=vmem, size = 0x9000, scoped, tag = 'internal scratch']
  %s0 = inlined_call_operand.vmem [shape: f32[2,8,32], index: 0, kind: input, shape index: {}]
  %s1 = inlined_call_operand.vmem [shape: f32[4,32,8], index: 1, kind: input, shape index: {}]
  %s2 = inlined_call_operand.vmem [shape: f32[4,32,8], index: 2, kind: input, shape index: {}]
  %s3 = inlined_call_operand.vmem [shape: f32[4,8,32], index: 3, kind: input, shape index: {}]
  %s4 = inlined_call_operand.vmem [shape: f32[1,32], index: 4, kind: input, shape index: {}]
  %s5 = inlined_call_operand.hbm [shape: f32[2,8,32], index: 5, kind: output, shape index: {}]
  %s6 = sld [smem:[#allocation0]]
  $region53: #{tpu_custom_call.1} parent=0
    _
  %s8 = ssub.s32 1, %s6
  %s9 = scalar_select 0, %s8, %s6
  $region1: #{tpu_custom_call.1} parent=0
    #allocation2 [shape = 'u8[8192]{0}', space=vmem, size = 0x2000, scoped, tag = 'output window, operand 0']
    #allocation3 [shape = 's32[2]{0}', space=sflag, size = 0x8, scoped, tag = 'scoped memory for tpu_custom_call.1']
    %10 = vsyncpa [#allocation3], 0
    %s11 = scalar_lea.sflag [#allocation3], 1
    %12 = vsyncpa %s11, 0
    loop: start=0, step=1, limit=4
    $region2: #{tpu_custom_call.1} parent=1 // loop_pre_header
      _
    $region3: #{tpu_custom_call.1} parent=1 // loop_header
      %s14 = sphi 0, %s18
      %p15 = scmp.ge.s32.totalorder %s14, 4
      %s24 = sphi 0, %s26
      %s27 = sphi 0, %s24
      %s28 = sphi 0, %s27
      %s44 = sphi 0, %s28
      %s48 = sphi 0, %s48
      %s50 = sphi 0, %s48
      %s51 = sphi 0, %s50
      %s65 = sphi 0, %s51
      %s69 = sphi 0, %s69
      %s71 = sphi 0, %s69
      %s72 = sphi 0, %s71
      %s86 = sphi 0, %s72
      %s90 = sphi 0, %s90
      %s92 = sphi 0, %s90
      %s93 = sphi 0, %s92
      %s107 = sphi 0, %s93
      %s111 = sphi 0, %s111
      %s113 = sphi 0, %s111
      %s114 = sphi 0, %s113
      %s128 = sphi 0, %s114
      %s134 = sphi 0, %s136
      %s137 = sphi 0, %s134
      %s138 = sphi 0, %s137
      %s154 = sphi 0, %s138
    $region4: #{tpu_custom_call.1} parent=1 // loop_header_branch
      %17 = sbr.rel (%p15) target = $region8
    $region5: #{tpu_custom_call.1} parent=1 // loop_body
      %s19 = ssub.s32 %s14, 1
      %s20 = ssub.s32 %s14, 2
      %s21 = sadd.s32 %s14, 1
      %s22 = ssub.s32 %s14, %s21
      %p23 = scmp.eq.s32.totalorder %s22, 0
      %s25 = sadd.s32 %s24, 1
      %s26 = scalar_select %p23, %s24, %s25
      %p29 = pneg %p23
      %p30 = scmp.eq.s32.totalorder %s14, 1
      %p31 = por %p29, %p30
      %p32 = scmp.ne.s32.totalorder %s24, %s27
      %p33 = scmp.eq.s32.totalorder %s14, 0
      %p34 = por %p32, %p33
      %p35 = scmp.ne.s32.totalorder %s24, %s27
      %p36 = scmp.eq.s32.totalorder %s19, 1
      %p37 = por %p35, %p36
      %p38 = scmp.ne.s32.totalorder %s27, %s28
      %p39 = scmp.eq.s32.totalorder %s19, 0
      %p40 = por %p38, %p39
      %p41 = scmp.ne.s32.totalorder %s27, %s28
      %p42 = scmp.eq.s32.totalorder %s20, 1
      %p43 = por %p41, %p42
      %p45 = scmp.ne.s32.totalorder %s28, %s44
      %p46 = scmp.eq.s32.totalorder %s20, 0
      %p47 = por %p45, %p46
      %s49 = sadd.s32 %s48, 1
      %p52 = scmp.eq.s32.totalorder %s14, 1
      %p53 = scmp.ne.s32.totalorder %s48, %s50
      %p54 = scmp.eq.s32.totalorder %s14, 0
      %p55 = por %p53, %p54
      %p56 = scmp.ne.s32.totalorder %s48, %s50
      %p57 = scmp.eq.s32.totalorder %s19, 1
      %p58 = por %p56, %p57
      %p59 = scmp.ne.s32.totalorder %s50, %s51
      %p60 = scmp.eq.s32.totalorder %s19, 0
      %p61 = por %p59, %p60
      %p62 = scmp.ne.s32.totalorder %s50, %s51
      %p63 = scmp.eq.s32.totalorder %s20, 1
      %p64 = por %p62, %p63
      %p66 = scmp.ne.s32.totalorder %s51, %s65
      %p67 = scmp.eq.s32.totalorder %s20, 0
      %p68 = por %p66, %p67
      %s70 = sadd.s32 %s69, 1
      %p73 = scmp.eq.s32.totalorder %s14, 1
      %p74 = scmp.ne.s32.totalorder %s69, %s71
      %p75 = scmp.eq.s32.totalorder %s14, 0
      %p76 = por %p74, %p75
      %p77 = scmp.ne.s32.totalorder %s69, %s71
      %p78 = scmp.eq.s32.totalorder %s19, 1
      %p79 = por %p77, %p78
      %p80 = scmp.ne.s32.totalorder %s71, %s72
      %p81 = scmp.eq.s32.totalorder %s19, 0
      %p82 = por %p80, %p81
      %p83 = scmp.ne.s32.totalorder %s71, %s72
      %p84 = scmp.eq.s32.totalorder %s20, 1
      %p85 = por %p83, %p84
      %p87 = scmp.ne.s32.totalorder %s72, %s86
      %p88 = scmp.eq.s32.totalorder %s20, 0
      %p89 = por %p87, %p88
      %s91 = sadd.s32 %s90, 1
      %p94 = scmp.eq.s32.totalorder %s14, 1
      %p95 = scmp.ne.s32.totalorder %s90, %s92
      %p96 = scmp.eq.s32.totalorder %s14, 0
      %p97 = por %p95, %p96
      %p98 = scmp.ne.s32.totalorder %s90, %s92
      %p99 = scmp.eq.s32.totalorder %s19, 1
      %p100 = por %p98, %p99
      %p101 = scmp.ne.s32.totalorder %s92, %s93
      %p102 = scmp.eq.s32.totalorder %s19, 0
      %p103 = por %p101, %p102
      %p104 = scmp.ne.s32.totalorder %s92, %s93
      %p105 = scmp.eq.s32.totalorder %s20, 1
      %p106 = por %p104, %p105
      %p108 = scmp.ne.s32.totalorder %s93, %s107
      %p109 = scmp.eq.s32.totalorder %s20, 0
      %p110 = por %p108, %p109
      %s112 = sadd.s32 %s111, 1
      %p115 = scmp.eq.s32.totalorder %s14, 1
      %p116 = scmp.ne.s32.totalorder %s111, %s113
      %p117 = scmp.eq.s32.totalorder %s14, 0
      %p118 = por %p116, %p117
      %p119 = scmp.ne.s32.totalorder %s111, %s113
      %p120 = scmp.eq.s32.totalorder %s19, 1
      %p121 = por %p119, %p120
      %p122 = scmp.ne.s32.totalorder %s113, %s114
      %p123 = scmp.eq.s32.totalorder %s19, 0
      %p124 = por %p122, %p123
      %p125 = scmp.ne.s32.totalorder %s113, %s114
      %p126 = scmp.eq.s32.totalorder %s20, 1
      %p127 = por %p125, %p126
      %p129 = scmp.ne.s32.totalorder %s114, %s128
      %p130 = scmp.eq.s32.totalorder %s20, 0
      %p131 = por %p129, %p130
      %s132 = ssub.s32 %s14, %s21
      %p133 = scmp.eq.s32.totalorder %s132, 0
      %s135 = sadd.s32 %s134, 1
      %s136 = scalar_select %p133, %s134, %s135
      %p139 = pneg %p133
      %p140 = scmp.eq.s32.totalorder %s14, 1
      %p141 = por %p139, %p140
      %p142 = scmp.ne.s32.totalorder %s134, %s137
      %p143 = scmp.eq.s32.totalorder %s14, 0
      %p144 = por %p142, %p143
      %p145 = scmp.ne.s32.totalorder %s134, %s137
      %p146 = scmp.eq.s32.totalorder %s19, 1
      %p147 = por %p145, %p146
      %p148 = scmp.ne.s32.totalorder %s137, %s138
      %p149 = scmp.eq.s32.totalorder %s19, 0
      %p150 = por %p148, %p149
      %p151 = scmp.ne.s32.totalorder %s137, %s138
      %p152 = scmp.eq.s32.totalorder %s20, 1
      %p153 = por %p151, %p152
      %p155 = scmp.ne.s32.totalorder %s138, %s154
      %p156 = scmp.eq.s32.totalorder %s20, 0
      %p157 = por %p155, %p156
      %p158 = scmp.le.s32.totalorder 1, %s14
      %p159 = scmp.lt.s32.totalorder %s14, 3
      %p160 = pnand %p158, %p159
      %p161 = pneg %p160
      // Predicated region
      $region9: #{tpu_custom_call.1} parent=5 // pred_check
        _
      $region10: #{tpu_custom_call.1} parent=5 // pred_check_branch
        %163 = sbr.rel (%p160) target = $region12
      $region11: #{tpu_custom_call.1} parent=5 // pred_region
        %s164 = ssub.s32 %s14, 1
        // Predicated region
        $region13: #{tpu_custom_call.1} parent=11 // pred_check
          %p165 = pneg %p61
        $region14: #{tpu_custom_call.1} parent=11 // pred_check_branch
          %167 = sbr.rel (%p165) target = $region16
        $region15: #{tpu_custom_call.1} parent=11 // pred_region
          _
        $region16: #{tpu_custom_call.1} parent=11 // pred_fallthru
          _
        // Predicated region
        $region17: #{tpu_custom_call.1} parent=11 // pred_check
          %p168 = pneg %p82
        $region18: #{tpu_custom_call.1} parent=11 // pred_check_branch
          %170 = sbr.rel (%p168) target = $region20
        $region19: #{tpu_custom_call.1} parent=11 // pred_region
          _
        $region20: #{tpu_custom_call.1} parent=11 // pred_fallthru
          _
        // Predicated region
        $region21: #{tpu_custom_call.1} parent=11 // pred_check
          %p171 = pneg %p103
        $region22: #{tpu_custom_call.1} parent=11 // pred_check_branch
          %173 = sbr.rel (%p171) target = $region24
        $region23: #{tpu_custom_call.1} parent=11 // pred_region
          _
        $region24: #{tpu_custom_call.1} parent=11 // pred_fallthru
          _
        // Predicated region
        $region25: #{tpu_custom_call.1} parent=11 // pred_check
          %p174 = pneg %p124
        $region26: #{tpu_custom_call.1} parent=11 // pred_check_branch
          %176 = sbr.rel (%p174) target = $region28
        $region27: #{tpu_custom_call.1} parent=11 // pred_region
          _
        $region28: #{tpu_custom_call.1} parent=11 // pred_fallthru
          _
      $region12: #{tpu_custom_call.1} parent=5 // pred_fallthru
        _
      %p177 = scmp.lt.s32.totalorder %s14, 2
      // Predicated region
      $region29: #{tpu_custom_call.1} parent=5 // pred_check
        %p178 = pneg %p177
      $region30: #{tpu_custom_call.1} parent=5 // pred_check_branch
        %180 = sbr.rel (%p178) target = $region32
      $region31: #{tpu_custom_call.1} parent=5 // pred_region
        // Predicated region
        $region33: #{tpu_custom_call.1} parent=31 // pred_check
          %p181 = pneg %p34
        $region34: #{tpu_custom_call.1} parent=31 // pred_check_branch
          %183 = sbr.rel (%p181) target = $region36
        $region35: #{tpu_custom_call.1} parent=31 // pred_region
          %p184 = scmp.lt.s32.totalorder %s14, 1
          %s185 = scalar_select %p184, %s14, 1
          %s186 = smul.addr %s185, 8
          %s187 = scalar_lea.vmem %s0, %s186
        $region36: #{tpu_custom_call.1} parent=31 // pred_fallthru
          _
      $region32: #{tpu_custom_call.1} parent=5 // pred_fallthru
        _
      %p188 = scmp.le.s32.totalorder 1, %s14
      %p189 = scmp.lt.s32.totalorder %s14, 3
      %p190 = pnand %p188, %p189
      %p191 = pneg %p190
      // Predicated region
      $region37: #{tpu_custom_call.1} parent=5 // pred_check
        _
      $region38: #{tpu_custom_call.1} parent=5 // pred_check_branch
        %193 = sbr.rel (%p190) target = $region40
      $region39: #{tpu_custom_call.1} parent=5 // pred_region
        %s194 = ssub.s32 %s14, 1
        %p195 = scmp.lt.s32.totalorder %s19, 1
        %s196 = scalar_select %p195, %s19, 1
        %s197 = smul.addr %s196, 8
        %s198 = scalar_lea.vmem %s0, %s197
        %p199 = pneg %p40
        %p200 = pneg %p37
        %p201 = pneg %p61
        %p202 = pneg %p58
        %p203 = pneg %p82
        %p204 = pneg %p79
        %p205 = pneg %p103
        %p206 = pneg %p100
        %p207 = pneg %p124
        %p208 = pneg %p121
        %p209 = pneg %p150
        %p210 = pneg %p147
        %s211 = sand.u32 %s137, 1
        %s212 = scalar_lea.sflag [#allocation3], %s211
        %s213 = sand.u32 %s137, 1
        %s214 = smul.addr %s213, 8
        %s215 = scalar_lea.vmem [#allocation2], %s214
        %p216 = scmp.lt.s32.totalorder %s19, 1
        %s217 = scalar_select %p216, %s19, 1
        %s218 = smul.addr %s217, 8
        %s219 = scalar_lea.vmem %s0, %s218
        %v220 = vld [vmem:[%s219] sm:$0xff]
        %v221 = vld [vmem:[%s1] sm:$0xff]
        %v222 = vld [vmem:[%s1 + $0x8] sm:$0xff]
        %v223 = vld [vmem:[%s1 + $0x10] sm:$0xff]
        %v224 = vld [vmem:[%s1 + $0x18] sm:$0xff]
        %vm225 = vcmask 261120
        %v227 = vsel %vm225, %v220, 0
        %229 = vmatpush.msra.mxu0 0.0
        %230 = vmatpush.msra.mxu0 0.0
        %231 = vmatpush.msra.mxu0 0.0
        %232 = vmatpush.msra.mxu0 0.0
        %233 = vmatpush.msra.mxu0 0.0
        %234 = vmatpush.msra.mxu0 0.0
        %235 = vmatpush.msra.mxu0 0.0
        %236 = vmatpush.msra.mxu0 0.0
        %237 = vmatpush.msra.mxu0 0.0
        %238 = vmatpush.msra.mxu0 0.0
        %239 = vmatpush.msra.mxu0 0.0
        %240 = vmatpush.msra.mxu0 0.0
        %241 = vmatpush.msra.mxu0 %v224
        %242 = vmatpush.msra.mxu0 %v223
        %243 = vmatpush.msra.mxu0 %v222
        %244 = vmatpush.msra.mxu0 %v221
        %245 = vmatmul.f32.gmra.mxu0 %v227
        %v246 = vpop.f32.mrf.mxu0
        %v247 = vadd.f32 0.0, %v246
        %248 = vdwg.mxu0
        %v249 = vld [vmem:[%s2] sm:$0xff]
        %v250 = vld [vmem:[%s2 + $0x8] sm:$0xff]
        %v251 = vld [vmem:[%s2 + $0x10] sm:$0xff]
        %v252 = vld [vmem:[%s2 + $0x18] sm:$0xff]
        %253 = vmatpush.msra.mxu0 0.0
        %254 = vmatpush.msra.mxu0 0.0
        %255 = vmatpush.msra.mxu0 0.0
        %256 = vmatpush.msra.mxu0 0.0
        %257 = vmatpush.msra.mxu0 0.0
        %258 = vmatpush.msra.mxu0 0.0
        %259 = vmatpush.msra.mxu0 0.0
        %260 = vmatpush.msra.mxu0 0.0
        %261 = vmatpush.msra.mxu0 0.0
        %262 = vmatpush.msra.mxu0 0.0
        %263 = vmatpush.msra.mxu0 0.0
        %264 = vmatpush.msra.mxu0 0.0
        %265 = vmatpush.msra.mxu0 %v252
        %266 = vmatpush.msra.mxu0 %v251
        %267 = vmatpush.msra.mxu0 %v250
        %268 = vmatpush.msra.mxu0 %v249
        %269 = vmatmul.f32.gmra.mxu0 %v227
        %v270 = vpop.f32.mrf.mxu0
        %v271 = vadd.f32 0.0, %v270
        %272 = vdwg.mxu0
        %vm273 = vcmask 64512
        %v275 = vsel %vm273, %v247, 0
        %277 = vmatpush.xpose.msra.mxu0 0.0
        %278 = vmatpush.xpose.msra.mxu0 0.0
        %279 = vmatpush.xpose.msra.mxu0 0.0
        %280 = vmatpush.xpose.msra.mxu0 0.0
        %281 = vmatpush.xpose.msra.mxu0 0.0
        %282 = vmatpush.xpose.msra.mxu0 0.0
        %283 = vmatpush.xpose.msra.mxu0 0.0
        %284 = vmatpush.xpose.msra.mxu0 0.0
        %285 = vmatpush.xpose.msra.mxu0 0.0
        %286 = vmatpush.xpose.msra.mxu0 0.0
        %287 = vmatpush.xpose.msra.mxu0 0.0
        %288 = vmatpush.xpose.msra.mxu0 0.0
        %289 = vmatpush.xpose.msra.mxu0 0.0
        %290 = vmatpush.xpose.msra.mxu0 0.0
        %291 = vmatpush.xpose.msra.mxu0 0.0
        %292 = vmatpush.xpose.msra.mxu0 %v275
        %293 = vmatmul.f32.gmra.mxu0 %v275
        %v294 = vpop.f32.mrf.mxu0
        %v295 = vadd.f32 0.0, %v294
        %296 = vdwg.mxu0
        %v297 = vmul.f32 %v247, %v247
        %v298 = vsel %vm273, %v297, 0.0
        %299 = vadd.xlane.f32.xlu0 %v298
        %v300 = vpop.xlane.xlu0 %299
        %v301 = vmul.f32 %v300, 0.5
        %v303 = vlaneseq
        %v304 = vand.u32 %v303, 127
        %v305 = vperm.slane %v301, %v304
        %vm306 = vcmask 1042434
        %v307 = vsel %vm306, %v305, %v305
        %vm308 = vcmask 1043459
        %v309 = vsel %vm308, %v305, %v307
        %vm310 = vcmask 1044484
        %v311 = vsel %vm310, %v305, %v309
        %vm312 = vcmask 1045509
        %v313 = vsel %vm312, %v305, %v311
        %vm314 = vcmask 1046534
        %v315 = vsel %vm314, %v305, %v313
        %vm316 = vcmask 1047559
        %v317 = vsel %vm316, %v305, %v315
        %v319 = vsub.f32 %v295, %v317
        %v320 = vsel %vm273, %v319, -inf
        %321 = vmax.xlane.f32.xlu0 %v320
        %v322 = vpop.xlane.xlu0 %321
        %v323 = vsub.f32 %v319, %v322
        %v324 = vmul.f32 %v323, 1.442695
        %v325 = vpow.pop %v324
        %v326 = vsel %vm273, %v325, 0.0
        %327 = vadd.xlane.f32.xlu0 %v326
        %v328 = vpop.xlane.xlu0 %327
        %v329 = vrcp.pop %v328
        %v330 = vmul.f32 %v325, %v329
        %v332 = vsel %vm273, %v330, 0
        %334 = vmatpush.msra.mxu0 0.0
        %335 = vmatpush.msra.mxu0 0.0
        %336 = vmatpush.msra.mxu0 0.0
        %337 = vmatpush.msra.mxu0 0.0
        %338 = vmatpush.msra.mxu0 0.0
        %339 = vmatpush.msra.mxu0 0.0
        %340 = vmatpush.msra.mxu0 0.0
        %341 = vmatpush.msra.mxu0 0.0
        %342 = vmatpush.msra.mxu0 0.0
        %343 = vmatpush.msra.mxu0 0.0
        %344 = vmatpush.msra.mxu0 0.0
        %345 = vmatpush.msra.mxu0 0.0
        %346 = vmatpush.msra.mxu0 0.0
        %347 = vmatpush.msra.mxu0 0.0
        %348 = vmatpush.msra.mxu0 0.0
        %349 = vmatpush.msra.mxu0 %v271
        %350 = vmatmul.f32.gmra.mxu0 %v332
        %v351 = vpop.f32.mrf.mxu0
        %v352 = vadd.f32 0.0, %v351
        %353 = vdwg.mxu0
        %v354 = vld [vmem:[%s3] sm:$0xff]
        %s355 = scalar_lea.vmem %s1, 32
        %v356 = vld [vmem:[%s355] sm:$0xff]
        %v357 = vld [vmem:[%s355 + $0x8] sm:$0xff]
        %v358 = vld [vmem:[%s355 + $0x10] sm:$0xff]
        %v359 = vld [vmem:[%s355 + $0x18] sm:$0xff]
        %360 = vmatpush.msra.mxu0 0.0
        %361 = vmatpush.msra.mxu0 0.0
        %362 = vmatpush.msra.mxu0 0.0
        %363 = vmatpush.msra.mxu0 0.0
        %364 = vmatpush.msra.mxu0 0.0
        %365 = vmatpush.msra.mxu0 0.0
        %366 = vmatpush.msra.mxu0 0.0
        %367 = vmatpush.msra.mxu0 0.0
        %368 = vmatpush.msra.mxu0 0.0
        %369 = vmatpush.msra.mxu0 0.0
        %370 = vmatpush.msra.mxu0 0.0
        %371 = vmatpush.msra.mxu0 0.0
        %372 = vmatpush.msra.mxu0 %v359
        %373 = vmatpush.msra.mxu0 %v358
        %374 = vmatpush.msra.mxu0 %v357
        %375 = vmatpush.msra.mxu0 %v356
        %376 = vmatmul.f32.gmra.mxu0 %v227
        %v377 = vpop.f32.mrf.mxu0
        %v378 = vadd.f32 0.0, %v377
        %379 = vdwg.mxu0
        %s380 = scalar_lea.vmem %s2, 32
        %v381 = vld [vmem:[%s380] sm:$0xff]
        %v382 = vld [vmem:[%s380 + $0x8] sm:$0xff]
        %v383 = vld [vmem:[%s380 + $0x10] sm:$0xff]
        %v384 = vld [vmem:[%s380 + $0x18] sm:$0xff]
        %385 = vmatpush.msra.mxu0 0.0
        %386 = vmatpush.msra.mxu0 0.0
        %387 = vmatpush.msra.mxu0 0.0
        %388 = vmatpush.msra.mxu0 0.0
        %389 = vmatpush.msra.mxu0 0.0
        %390 = vmatpush.msra.mxu0 0.0
        %391 = vmatpush.msra.mxu0 0.0
        %392 = vmatpush.msra.mxu0 0.0
        %393 = vmatpush.msra.mxu0 0.0
        %394 = vmatpush.msra.mxu0 0.0
        %395 = vmatpush.msra.mxu0 0.0
        %396 = vmatpush.msra.mxu0 0.0
        %397 = vmatpush.msra.mxu0 %v384
        %398 = vmatpush.msra.mxu0 %v383
        %399 = vmatpush.msra.mxu0 %v382
        %400 = vmatpush.msra.mxu0 %v381
        %401 = vmatmul.f32.gmra.mxu0 %v227
        %v402 = vpop.f32.mrf.mxu0
        %v403 = vadd.f32 0.0, %v402
        %404 = vdwg.mxu0
        %v406 = vsel %vm273, %v378, 0
        %408 = vmatpush.xpose.msra.mxu0 0.0
        %409 = vmatpush.xpose.msra.mxu0 0.0
        %410 = vmatpush.xpose.msra.mxu0 0.0
        %411 = vmatpush.xpose.msra.mxu0 0.0
        %412 = vmatpush.xpose.msra.mxu0 0.0
        %413 = vmatpush.xpose.msra.mxu0 0.0
        %414 = vmatpush.xpose.msra.mxu0 0.0
        %415 = vmatpush.xpose.msra.mxu0 0.0
        %416 = vmatpush.xpose.msra.mxu0 0.0
        %417 = vmatpush.xpose.msra.mxu0 0.0
        %418 = vmatpush.xpose.msra.mxu0 0.0
        %419 = vmatpush.xpose.msra.mxu0 0.0
        %420 = vmatpush.xpose.msra.mxu0 0.0
        %421 = vmatpush.xpose.msra.mxu0 0.0
        %422 = vmatpush.xpose.msra.mxu0 0.0
        %423 = vmatpush.xpose.msra.mxu0 %v406
        %424 = vmatmul.f32.gmra.mxu0 %v406
        %v425 = vpop.f32.mrf.mxu0
        %v426 = vadd.f32 0.0, %v425
        %427 = vdwg.mxu0
        %v428 = vmul.f32 %v378, %v378
        %v429 = vsel %vm273, %v428, 0.0
        %430 = vadd.xlane.f32.xlu0 %v429
        %v431 = vpop.xlane.xlu0 %430
        %v432 = vmul.f32 %v431, 0.5
        %v434 = vperm.slane %v432, %v304
        %v435 = vsel %vm306, %v434, %v434
        %v436 = vsel %vm308, %v434, %v435
        %v437 = vsel %vm310, %v434, %v436
        %v438 = vsel %vm312, %v434, %v437
        %v439 = vsel %vm314, %v434, %v438
        %v440 = vsel %vm316, %v434, %v439
        %v442 = vsub.f32 %v426, %v440
        %v443 = vsel %vm273, %v442, -inf
        %444 = vmax.xlane.f32.xlu0 %v443
        %v445 = vpop.xlane.xlu0 %444
        %v446 = vsub.f32 %v442, %v445
        %v447 = vmul.f32 %v446, 1.442695
        %v448 = vpow.pop %v447
        %v449 = vsel %vm273, %v448, 0.0
        %450 = vadd.xlane.f32.xlu0 %v449
        %v451 = vpop.xlane.xlu0 %450
        %v452 = vrcp.pop %v451
        %v453 = vmul.f32 %v448, %v452
        %v455 = vsel %vm273, %v453, 0
        %457 = vmatpush.msra.mxu0 0.0
        %458 = vmatpush.msra.mxu0 0.0
        %459 = vmatpush.msra.mxu0 0.0
        %460 = vmatpush.msra.mxu0 0.0
        %461 = vmatpush.msra.mxu0 0.0
        %462 = vmatpush.msra.mxu0 0.0
        %463 = vmatpush.msra.mxu0 0.0
        %464 = vmatpush.msra.mxu0 0.0
        %465 = vmatpush.msra.mxu0 0.0
        %466 = vmatpush.msra.mxu0 0.0
        %467 = vmatpush.msra.mxu0 0.0
        %468 = vmatpush.msra.mxu0 0.0
        %469 = vmatpush.msra.mxu0 0.0
        %470 = vmatpush.msra.mxu0 0.0
        %471 = vmatpush.msra.mxu0 0.0
        %472 = vmatpush.msra.mxu0 %v403
        %473 = vmatmul.f32.gmra.mxu0 %v455
        %v474 = vpop.f32.mrf.mxu0
        %v475 = vadd.f32 0.0, %v474
        %476 = vdwg.mxu0
        %s477 = scalar_lea.vmem %s3, 8
        %v478 = vld [vmem:[%s477] sm:$0xff]
        %v480 = vsel %vm273, %v475, 0
        %482 = vmatpush.msra.mxu0 0.0
        %483 = vmatpush.msra.mxu0 0.0
        %484 = vmatpush.msra.mxu0 0.0
        %485 = vmatpush.msra.mxu0 0.0
        %486 = vmatpush.msra.mxu0 0.0
        %487 = vmatpush.msra.mxu0 0.0
        %488 = vmatpush.msra.mxu0 0.0
        %489 = vmatpush.msra.mxu0 0.0
        %490 = vmatpush.msra.mxu0 0.0
        %491 = vmatpush.msra.mxu0 0.0
        %492 = vmatpush.msra.mxu0 0.0
        %493 = vmatpush.msra.mxu0 0.0
        %494 = vmatpush.msra.mxu0 0.0
        %495 = vmatpush.msra.mxu0 0.0
        %496 = vmatpush.msra.mxu0 0.0
        %497 = vmatpush.msra.mxu0 %v478
        %498 = vmatmul.f32.gmra.mxu0 %v480
        %v499 = vpop.f32.mrf.mxu0
        %v500 = vadd.f32 0.0, %v499
        %501 = vdwg.mxu0
        %v503 = vsel %vm273, %v352, 0
        %505 = vmatpush.msra.mxu0 0.0
        %506 = vmatpush.msra.mxu0 0.0
        %507 = vmatpush.msra.mxu0 0.0
        %508 = vmatpush.msra.mxu0 0.0
        %509 = vmatpush.msra.mxu0 0.0
        %510 = vmatpush.msra.mxu0 0.0
        %511 = vmatpush.msra.mxu0 0.0
        %512 = vmatpush.msra.mxu0 0.0
        %513 = vmatpush.msra.mxu0 0.0
        %514 = vmatpush.msra.mxu0 0.0
        %515 = vmatpush.msra.mxu0 0.0
        %516 = vmatpush.msra.mxu0 0.0
        %517 = vmatpush.msra.mxu0 0.0
        %518 = vmatpush.msra.mxu0 0.0
        %519 = vmatpush.msra.mxu0 0.0
        %520 = vmatpush.msra.mxu0 %v354
        %521 = vmatmul.f32.gmra.mxu0 %v503
        %v522 = vpop.f32.mrf.mxu0
        %v523 = vadd.f32 %v500, %v522
        %524 = vdwg.mxu0
        %s525 = scalar_lea.vmem %s1, 64
        %v526 = vld [vmem:[%s525] sm:$0xff]
        %v527 = vld [vmem:[%s525 + $0x8] sm:$0xff]
        %v528 = vld [vmem:[%s525 + $0x10] sm:$0xff]
        %v529 = vld [vmem:[%s525 + $0x18] sm:$0xff]
        %530 = vmatpush.msra.mxu0 0.0
        %531 = vmatpush.msra.mxu0 0.0
        %532 = vmatpush.msra.mxu0 0.0
        %533 = vmatpush.msra.mxu0 0.0
        %534 = vmatpush.msra.mxu0 0.0
        %535 = vmatpush.msra.mxu0 0.0
        %536 = vmatpush.msra.mxu0 0.0
        %537 = vmatpush.msra.mxu0 0.0
        %538 = vmatpush.msra.mxu0 0.0
        %539 = vmatpush.msra.mxu0 0.0
        %540 = vmatpush.msra.mxu0 0.0
        %541 = vmatpush.msra.mxu0 0.0
        %542 = vmatpush.msra.mxu0 %v529
        %543 = vmatpush.msra.mxu0 %v528
        %544 = vmatpush.msra.mxu0 %v527
        %545 = vmatpush.msra.mxu0 %v526
        %546 = vmatmul.f32.gmra.mxu0 %v227
        %v547 = vpop.f32.mrf.mxu0
        %v548 = vadd.f32 0.0, %v547
        %549 = vdwg.mxu0
        %s550 = scalar_lea.vmem %s2, 64
        %v551 = vld [vmem:[%s550] sm:$0xff]
        %v552 = vld [vmem:[%s550 + $0x8] sm:$0xff]
        %v553 = vld [vmem:[%s550 + $0x10] sm:$0xff]
        %v554 = vld [vmem:[%s550 + $0x18] sm:$0xff]
        %555 = vmatpush.msra.mxu0 0.0
        %556 = vmatpush.msra.mxu0 0.0
        %557 = vmatpush.msra.mxu0 0.0
        %558 = vmatpush.msra.mxu0 0.0
        %559 = vmatpush.msra.mxu0 0.0
        %560 = vmatpush.msra.mxu0 0.0
        %561 = vmatpush.msra.mxu0 0.0
        %562 = vmatpush.msra.mxu0 0.0
        %563 = vmatpush.msra.mxu0 0.0
        %564 = vmatpush.msra.mxu0 0.0
        %565 = vmatpush.msra.mxu0 0.0
        %566 = vmatpush.msra.mxu0 0.0
        %567 = vmatpush.msra.mxu0 %v554
        %568 = vmatpush.msra.mxu0 %v553
        %569 = vmatpush.msra.mxu0 %v552
        %570 = vmatpush.msra.mxu0 %v551
        %571 = vmatmul.f32.gmra.mxu0 %v227
        %v572 = vpop.f32.mrf.mxu0
        %v573 = vadd.f32 0.0, %v572
        %574 = vdwg.mxu0
        %v576 = vsel %vm273, %v548, 0
        %578 = vmatpush.xpose.msra.mxu0 0.0
        %579 = vmatpush.xpose.msra.mxu0 0.0
        %580 = vmatpush.xpose.msra.mxu0 0.0
        %581 = vmatpush.xpose.msra.mxu0 0.0
        %582 = vmatpush.xpose.msra.mxu0 0.0
        %583 = vmatpush.xpose.msra.mxu0 0.0
        %584 = vmatpush.xpose.msra.mxu0 0.0
        %585 = vmatpush.xpose.msra.mxu0 0.0
        %586 = vmatpush.xpose.msra.mxu0 0.0
        %587 = vmatpush.xpose.msra.mxu0 0.0
        %588 = vmatpush.xpose.msra.mxu0 0.0
        %589 = vmatpush.xpose.msra.mxu0 0.0
        %590 = vmatpush.xpose.msra.mxu0 0.0
        %591 = vmatpush.xpose.msra.mxu0 0.0
        %592 = vmatpush.xpose.msra.mxu0 0.0
        %593 = vmatpush.xpose.msra.mxu0 %v576
        %594 = vmatmul.f32.gmra.mxu0 %v576
        %v595 = vpop.f32.mrf.mxu0
        %v596 = vadd.f32 0.0, %v595
        %597 = vdwg.mxu0
        %v598 = vmul.f32 %v548, %v548
        %v599 = vsel %vm273, %v598, 0.0
        %600 = vadd.xlane.f32.xlu0 %v599
        %v601 = vpop.xlane.xlu0 %600
        %v602 = vmul.f32 %v601, 0.5
        %v604 = vperm.slane %v602, %v304
        %v605 = vsel %vm306, %v604, %v604
        %v606 = vsel %vm308, %v604, %v605
        %v607 = vsel %vm310, %v604, %v606
        %v608 = vsel %vm312, %v604, %v607
        %v609 = vsel %vm314, %v604, %v608
        %v610 = vsel %vm316, %v604, %v609
        %v612 = vsub.f32 %v596, %v610
        %v613 = vsel %vm273, %v612, -inf
        %614 = vmax.xlane.f32.xlu0 %v613
        %v615 = vpop.xlane.xlu0 %614
        %v616 = vsub.f32 %v612, %v615
        %v617 = vmul.f32 %v616, 1.442695
        %v618 = vpow.pop %v617
        %v619 = vsel %vm273, %v618, 0.0
        %620 = vadd.xlane.f32.xlu0 %v619
        %v621 = vpop.xlane.xlu0 %620
        %v622 = vrcp.pop %v621
        %v623 = vmul.f32 %v618, %v622
        %v625 = vsel %vm273, %v623, 0
        %627 = vmatpush.msra.mxu0 0.0
        %628 = vmatpush.msra.mxu0 0.0
        %629 = vmatpush.msra.mxu0 0.0
        %630 = vmatpush.msra.mxu0 0.0
        %631 = vmatpush.msra.mxu0 0.0
        %632 = vmatpush.msra.mxu0 0.0
        %633 = vmatpush.msra.mxu0 0.0
        %634 = vmatpush.msra.mxu0 0.0
        %635 = vmatpush.msra.mxu0 0.0
        %636 = vmatpush.msra.mxu0 0.0
        %637 = vmatpush.msra.mxu0 0.0
        %638 = vmatpush.msra.mxu0 0.0
        %639 = vmatpush.msra.mxu0 0.0
        %640 = vmatpush.msra.mxu0 0.0
        %641 = vmatpush.msra.mxu0 0.0
        %642 = vmatpush.msra.mxu0 %v573
        %643 = vmatmul.f32.gmra.mxu0 %v625
        %v644 = vpop.f32.mrf.mxu0
        %v645 = vadd.f32 0.0, %v644
        %646 = vdwg.mxu0
        %s647 = scalar_lea.vmem %s3, 16
        %v648 = vld [vmem:[%s647] sm:$0xff]
        %v650 = vsel %vm273, %v645, 0
        %652 = vmatpush.msra.mxu0 0.0
        %653 = vmatpush.msra.mxu0 0.0
        %654 = vmatpush.msra.mxu0 0.0
        %655 = vmatpush.msra.mxu0 0.0
        %656 = vmatpush.msra.mxu0 0.0
        %657 = vmatpush.msra.mxu0 0.0
        %658 = vmatpush.msra.mxu0 0.0
        %659 = vmatpush.msra.mxu0 0.0
        %660 = vmatpush.msra.mxu0 0.0
        %661 = vmatpush.msra.mxu0 0.0
        %662 = vmatpush.msra.mxu0 0.0
        %663 = vmatpush.msra.mxu0 0.0
        %664 = vmatpush.msra.mxu0 0.0
        %665 = vmatpush.msra.mxu0 0.0
        %666 = vmatpush.msra.mxu0 0.0
        %667 = vmatpush.msra.mxu0 %v648
        %668 = vmatmul.f32.gmra.mxu0 %v650
        %v669 = vpop.f32.mrf.mxu0
        %v670 = vadd.f32 0.0, %v669
        %671 = vdwg.mxu0
        %v672 = vadd.f32 %v523, %v670
        %s673 = scalar_lea.vmem %s1, 96
        %v674 = vld [vmem:[%s673] sm:$0xff]
        %v675 = vld [vmem:[%s673 + $0x8] sm:$0xff]
        %v676 = vld [vmem:[%s673 + $0x10] sm:$0xff]
        %v677 = vld [vmem:[%s673 + $0x18] sm:$0xff]
        %678 = vmatpush.msra.mxu0 0.0
        %679 = vmatpush.msra.mxu0 0.0
        %680 = vmatpush.msra.mxu0 0.0
        %681 = vmatpush.msra.mxu0 0.0
        %682 = vmatpush.msra.mxu0 0.0
        %683 = vmatpush.msra.mxu0 0.0
        %684 = vmatpush.msra.mxu0 0.0
        %685 = vmatpush.msra.mxu0 0.0
        %686 = vmatpush.msra.mxu0 0.0
        %687 = vmatpush.msra.mxu0 0.0
        %688 = vmatpush.msra.mxu0 0.0
        %689 = vmatpush.msra.mxu0 0.0
        %690 = vmatpush.msra.mxu0 %v677
        %691 = vmatpush.msra.mxu0 %v676
        %692 = vmatpush.msra.mxu0 %v675
        %693 = vmatpush.msra.mxu0 %v674
        %694 = vmatmul.f32.gmra.mxu0 %v227
        %v695 = vpop.f32.mrf.mxu0
        %v696 = vadd.f32 0.0, %v695
        %697 = vdwg.mxu0
        %s698 = scalar_lea.vmem %s2, 96
        %v699 = vld [vmem:[%s698] sm:$0xff]
        %v700 = vld [vmem:[%s698 + $0x8] sm:$0xff]
        %v701 = vld [vmem:[%s698 + $0x10] sm:$0xff]
        %v702 = vld [vmem:[%s698 + $0x18] sm:$0xff]
        %703 = vmatpush.msra.mxu0 0.0
        %704 = vmatpush.msra.mxu0 0.0
        %705 = vmatpush.msra.mxu0 0.0
        %706 = vmatpush.msra.mxu0 0.0
        %707 = vmatpush.msra.mxu0 0.0
        %708 = vmatpush.msra.mxu0 0.0
        %709 = vmatpush.msra.mxu0 0.0
        %710 = vmatpush.msra.mxu0 0.0
        %711 = vmatpush.msra.mxu0 0.0
        %712 = vmatpush.msra.mxu0 0.0
        %713 = vmatpush.msra.mxu0 0.0
        %714 = vmatpush.msra.mxu0 0.0
        %715 = vmatpush.msra.mxu0 %v702
        %716 = vmatpush.msra.mxu0 %v701
        %717 = vmatpush.msra.mxu0 %v700
        %718 = vmatpush.msra.mxu0 %v699
        %719 = vmatmul.f32.gmra.mxu0 %v227
        %v720 = vpop.f32.mrf.mxu0
        %v721 = vadd.f32 0.0, %v720
        %722 = vdwg.mxu0
        %v724 = vsel %vm273, %v696, 0
        %726 = vmatpush.xpose.msra.mxu0 0.0
        %727 = vmatpush.xpose.msra.mxu0 0.0
        %728 = vmatpush.xpose.msra.mxu0 0.0
        %729 = vmatpush.xpose.msra.mxu0 0.0
        %730 = vmatpush.xpose.msra.mxu0 0.0
        %731 = vmatpush.xpose.msra.mxu0 0.0
        %732 = vmatpush.xpose.msra.mxu0 0.0
        %733 = vmatpush.xpose.msra.mxu0 0.0
        %734 = vmatpush.xpose.msra.mxu0 0.0
        %735 = vmatpush.xpose.msra.mxu0 0.0
        %736 = vmatpush.xpose.msra.mxu0 0.0
        %737 = vmatpush.xpose.msra.mxu0 0.0
        %738 = vmatpush.xpose.msra.mxu0 0.0
        %739 = vmatpush.xpose.msra.mxu0 0.0
        %740 = vmatpush.xpose.msra.mxu0 0.0
        %741 = vmatpush.xpose.msra.mxu0 %v724
        %742 = vmatmul.f32.gmra.mxu0 %v724
        %v743 = vpop.f32.mrf.mxu0
        %v744 = vadd.f32 0.0, %v743
        %745 = vdwg.mxu0
        %v746 = vmul.f32 %v696, %v696
        %v747 = vsel %vm273, %v746, 0.0
        %748 = vadd.xlane.f32.xlu0 %v747
        %v749 = vpop.xlane.xlu0 %748
        %v750 = vmul.f32 %v749, 0.5
        %v752 = vperm.slane %v750, %v304
        %v753 = vsel %vm306, %v752, %v752
        %v754 = vsel %vm308, %v752, %v753
        %v755 = vsel %vm310, %v752, %v754
        %v756 = vsel %vm312, %v752, %v755
        %v757 = vsel %vm314, %v752, %v756
        %v758 = vsel %vm316, %v752, %v757
        %v760 = vsub.f32 %v744, %v758
        %v761 = vsel %vm273, %v760, -inf
        %762 = vmax.xlane.f32.xlu0 %v761
        %v763 = vpop.xlane.xlu0 %762
        %v764 = vsub.f32 %v760, %v763
        %v765 = vmul.f32 %v764, 1.442695
        %v766 = vpow.pop %v765
        %v767 = vsel %vm273, %v766, 0.0
        %768 = vadd.xlane.f32.xlu0 %v767
        %v769 = vpop.xlane.xlu0 %768
        %v770 = vrcp.pop %v769
        %v771 = vmul.f32 %v766, %v770
        %v773 = vsel %vm273, %v771, 0
        %775 = vmatpush.msra.mxu0 0.0
        %776 = vmatpush.msra.mxu0 0.0
        %777 = vmatpush.msra.mxu0 0.0
        %778 = vmatpush.msra.mxu0 0.0
        %779 = vmatpush.msra.mxu0 0.0
        %780 = vmatpush.msra.mxu0 0.0
        %781 = vmatpush.msra.mxu0 0.0
        %782 = vmatpush.msra.mxu0 0.0
        %783 = vmatpush.msra.mxu0 0.0
        %784 = vmatpush.msra.mxu0 0.0
        %785 = vmatpush.msra.mxu0 0.0
        %786 = vmatpush.msra.mxu0 0.0
        %787 = vmatpush.msra.mxu0 0.0
        %788 = vmatpush.msra.mxu0 0.0
        %789 = vmatpush.msra.mxu0 0.0
        %790 = vmatpush.msra.mxu0 %v721
        %791 = vmatmul.f32.gmra.mxu0 %v773
        %v792 = vpop.f32.mrf.mxu0
        %v793 = vadd.f32 0.0, %v792
        %794 = vdwg.mxu0
        %s795 = scalar_lea.vmem %s3, 24
        %v796 = vld [vmem:[%s795] sm:$0xff]
        %v798 = vsel %vm273, %v793, 0
        %800 = vmatpush.msra.mxu0 0.0
        %801 = vmatpush.msra.mxu0 0.0
        %802 = vmatpush.msra.mxu0 0.0
        %803 = vmatpush.msra.mxu0 0.0
        %804 = vmatpush.msra.mxu0 0.0
        %805 = vmatpush.msra.mxu0 0.0
        %806 = vmatpush.msra.mxu0 0.0
        %807 = vmatpush.msra.mxu0 0.0
        %808 = vmatpush.msra.mxu0 0.0
        %809 = vmatpush.msra.mxu0 0.0
        %810 = vmatpush.msra.mxu0 0.0
        %811 = vmatpush.msra.mxu0 0.0
        %812 = vmatpush.msra.mxu0 0.0
        %813 = vmatpush.msra.mxu0 0.0
        %814 = vmatpush.msra.mxu0 0.0
        %815 = vmatpush.msra.mxu0 %v796
        %816 = vmatmul.f32.gmra.mxu0 %v798
        %v817 = vpop.f32.mrf.mxu0
        %v818 = vadd.f32 0.0, %v817
        %819 = vdwg.mxu0
        %v820 = vadd.f32 %v672, %v818
        %v821 = vld [vmem:[%s4] sm:$0x1]
        %v823 = vperm.slane %v821, 0
        %v825 = vadd.f32 %v820, %v823
        %826 = vst.msk [vmem:[%s215] sm:$0xff] %vm225, %v825
        %s827 = sand.u32 %s137, 1
        %s828 = scalar_lea.sflag [#allocation3], %s827
        %s829 = sand.u32 %s137, 1
        %s830 = smul.addr %s829, 8
        %s831 = scalar_lea.vmem [#allocation2], %s830
        // Predicated region
        $region41: #{tpu_custom_call.1} parent=39 // pred_check
          %p832 = pneg %p147
        $region42: #{tpu_custom_call.1} parent=39 // pred_check_branch
          %834 = sbr.rel (%p832) target = $region44
        $region43: #{tpu_custom_call.1} parent=39 // pred_region
          %836 = vsyncadd %s828, 0
          %s837 = smul.addr %s19, 8
          %s838 = scalar_lea.hbm %s5, %s837
          %s840 = sshll.u32 %s831, 4
          %s841 = int_to_ptr.vmem [resolvable:$true] %s840
          %s842 = sshll.u32 %s838, 4
          %s843 = int_to_ptr.hbm [resolvable:$true] %s842
          %845 = dma.vmem_to_hbm [thread:$0]  %s841, 128, %s843, %s828
        $region44: #{tpu_custom_call.1} parent=39 // pred_fallthru
          _
      $region40: #{tpu_custom_call.1} parent=5 // pred_fallthru
        _
      %p846 = scmp.le.s32.totalorder 2, %s14
      // Predicated region
      $region45: #{tpu_custom_call.1} parent=5 // pred_check
        %p847 = pneg %p846
      $region46: #{tpu_custom_call.1} parent=5 // pred_check_branch
        %849 = sbr.rel (%p847) target = $region48
      $region47: #{tpu_custom_call.1} parent=5 // pred_region
        %s850 = ssub.s32 %s14, 2
        // Predicated region
        $region49: #{tpu_custom_call.1} parent=47 // pred_check
          %p851 = pneg %p153
        $region50: #{tpu_custom_call.1} parent=47 // pred_check_branch
          %853 = sbr.rel (%p851) target = $region52
        $region51: #{tpu_custom_call.1} parent=47 // pred_region
          %s854 = sand.u32 %s138, 1
          %s855 = scalar_lea.sflag [#allocation3], %s854
          %s856 = sand.u32 %s138, 1
          %s857 = smul.addr %s856, 8
          %s858 = scalar_lea.vmem [#allocation2], %s857
          %860 = dma.done %s855, 128
        $region52: #{tpu_custom_call.1} parent=47 // pred_fallthru
          _
      $region48: #{tpu_custom_call.1} parent=5 // pred_fallthru
        _
    $region6: #{tpu_custom_call.1} parent=1 // loop_footer
      %s18 = sadd.s32 1, %s14
    $region7: #{tpu_custom_call.1} parent=1 // loop_footer_branch
      %13 = sbr.rel target = $region3
    $region8: #{tpu_custom_call.1} parent=1 // loop_exit
      _
    %861 = vsyncpa [#allocation3], 1
    %s862 = scalar_lea.sflag [#allocation3], 1
    %863 = vsyncpa %s862, 1

</llo_original>
